<compile_context>
chip_gen: v7x
topology: tpu7x:2x2x1
jax: 0.10.0
libtpu: 0.0.40
codegen_flags: <defaults>
</compile_context>

<pallas_src>
import functools

import jax
import jax.numpy as jnp
from jax.experimental import pallas as pl
from jax.experimental.pallas import tpu as pltpu


def _pick_tile(hw_pad, cap):
    """Largest multiple of 128 that divides hw_pad and is <= cap.

    hw_pad is always a multiple of 128, so 128 is a valid fallback.
    """
    best = 128
    t = 128
    while t <= min(hw_pad, cap):
        if hw_pad % t == 0:
            best = t
        t += 128
    return best


def _raft_kernel(H, W, C,
                 bx_ref, by_ref, im1_ref, im2p_ref, im2s_ref,
                 w1_ref, w2_ref, b_ref,
                 flow_ref, conf_ref):
    P = im1_ref.shape[2]

    im1 = im1_ref[0]        # (C, P), values in [0, 1]
    im2_p = im2p_ref[0]     # (C, P), same pixel block as im1

    # ---- flow-predictor stand-in: 1x1 conv over [im1, im2]; the `im * 255`
    # ---- scale is folded into the SMEM weights on the host.  Runs once per
    # ---- p-block (no inner q loop any more).
    fx = jnp.zeros((1, P), jnp.float32) + b_ref[0]
    fy = jnp.zeros((1, P), jnp.float32) + b_ref[1]
    for c in range(C):                              # C is tiny and static
        i1c = im1[c:c + 1, :]
        i2c = im2_p[c:c + 1, :]
        fx = fx + w1_ref[0, c] * i1c + w2_ref[0, c] * i2c
        fy = fy + w1_ref[1, c] * i1c + w2_ref[1, c] * i2c

    # ---- source coords: align_corners=True + border padding == plain clamp
    # (grid_sample's normalize/denormalize round-trip is the identity).
    ix = jnp.clip(bx_ref[...] + fx, 0.0, W - 1.0)   # (1, P)
    iy = jnp.clip(by_ref[...] + fy, 0.0, H - 1.0)
    ix0 = jnp.floor(ix)
    iy0 = jnp.floor(iy)
    wx1 = ix - ix0
    wx0 = 1.0 - wx1
    wy1 = iy - iy0
    wy0 = 1.0 - wy1
    ix0i = ix0.astype(jnp.int32)
    iy0i = iy0.astype(jnp.int32)
    ix1i = jnp.minimum(ix0i + 1, W - 1)             # weight is 0 when clamped
    iy1i = jnp.minimum(iy0i + 1, H - 1)

    # ---- separable bilinear warp ----
    # out[c, p] = sum_h sum_x im2[c, h, x] * Wy[h, p] * Wx[x, p]
    # Stage A (MXU): column blend  (C*H, W) @ (W, P) -> (C*H, P)
    # Stage B (VPU): per-channel row blend fused with the conf reduction.
    x_iota = jax.lax.broadcasted_iota(jnp.int32, (W, P), 0)
    wx = ((x_iota == ix0i).astype(jnp.float32) * wx0
          + (x_iota == ix1i).astype(jnp.float32) * wx1)       # (W, P)
    y_iota = jax.lax.broadcasted_iota(jnp.int32, (H, P), 0)
    wy = ((y_iota == iy0i).astype(jnp.float32) * wy0
          + (y_iota == iy1i).astype(jnp.float32) * wy1)       # (H, P)

    colb = jnp.dot(im2s_ref[0], wx,
                   preferred_element_type=jnp.float32)        # (C*H, P)

    nrm = jnp.zeros((1, P), jnp.float32)
    for c in range(C):
        res_c = jnp.sum(colb[c * H:(c + 1) * H, :] * wy,
                        axis=0, keepdims=True)                # (1, P) resampled
        d = im1[c:c + 1, :] - res_c
        nrm = nrm + d * d

    # With border padding, grid_sample(ones) is identically 1 (the clamped
    # bilinear weights sum to 1), so the PyTorch `output * mask` == output.
    flow_ref[0, 0:1, :] = fx
    flow_ref[0, 1:2, :] = fy
    # conf = (sum_c (im1 - resample(im2, flow))^2 < 0.01).float()
    # (self.norm in the spec is a sum of squares, dim=1, keepdim=True)
    conf_ref[0] = (nrm < 0.01).astype(jnp.float32)


def raft_forward(im1, im2, w1, w2, bias):
    """im1, im2: (B, C, H, W) float32 in [0, 1].

    w1, w2: (2, C) stand-in flow-predictor weights (row 0 -> x-flow, row 1 ->
    y-flow); bias: (2,).  Returns (flow_up (B,2,H,W), conf (B,1,H,W)).
    """
    B, C, H, W = im1.shape
    HW = H * W
    HW_pad = ((HW + 127) // 128) * 128   # lane-axis padding: never fall back
    pad = HW_pad - HW                    # to a full-size (unaligned) block.

    # Lane-dense working layout: (B, C, HW) -- pure reshape, no transpose.
    im1f = im1.reshape(B, C, HW)
    im2f = im2.reshape(B, C, HW)
    if pad:
        im1f = jnp.pad(im1f, ((0, 0), (0, 0), (0, pad)))
        im2f = jnp.pad(im2f, ((0, 0), (0, 0), (0, pad)))
    # Per-batch resident source slab for the warp matmul (pure reshape).
    im2s = im2.reshape(B, C * H, W)

    # Fold the `im * 255` scaling of the PyTorch forward into the weights.
    w1s = (w1 * 255.0).astype(jnp.float32)
    w2s = (w2 * 255.0).astype(jnp.float32)
    bias = bias.astype(jnp.float32)

    # Base pixel grid (batch-independent), precomputed on the host; integer
    # div/mod on vectors is avoided in-kernel for robust lowering.
    base_x = jnp.tile(jnp.arange(W, dtype=jnp.float32), H).reshape(1, HW)
    base_y = jnp.repeat(jnp.arange(H, dtype=jnp.float32), W).reshape(1, HW)
    if pad:
        base_x = jnp.pad(base_x, ((0, 0), (0, pad)))
        base_y = jnp.pad(base_y, ((0, 0), (0, pad)))

    # Output-pixel tile (lane axis).  Cap it so the (C*H, p_tile) matmul
    # intermediate stays ~<=4 MiB (v7x has only 64 MiB physical VMEM).
    inter_budget = 4 * 1024 * 1024
    p_cap = max(128, min(2048, (inter_budget // (4 * C * H)) // 128 * 128))
    p_tile = _pick_tile(HW_pad, p_cap)
    # Keep B * n_p >= 2 and even when possible so v7x's two TCs stay balanced.
    if B % 2 == 1 and HW_pad // p_tile == 1 and HW_pad >= 256:
        p_tile = _pick_tile(HW_pad, p_tile // 2)
    n_p = HW_pad // p_tile

    kernel = functools.partial(_raft_kernel, H, W, C)

    cost = pl.CostEstimate(
        flops=int(B * HW_pad * (2 * C * H * W + 4 * (H + W) + 3 * C * H + 40)),
        transcendentals=0,
        bytes_accessed=int(4 * B * (2 * HW_pad            # base grids
                                    + 2 * C * HW_pad      # im1 + im2 p-blocks
                                    + C * HW              # im2 slab (per batch)
                                    + 3 * HW_pad)),       # flow + conf
    )

    flow_flat, conf_flat = pl.pallas_call(
        kernel,
        out_shape=(
            jax.ShapeDtypeStruct((B, 2, HW_pad), jnp.float32),
            jax.ShapeDtypeStruct((B, 1, HW_pad), jnp.float32),
        ),
        grid_spec=pltpu.PrefetchScalarGridSpec(
            num_scalar_prefetch=0,
            grid=(B, n_p),
            in_specs=[
                pl.BlockSpec((1, p_tile), lambda b, p: (0, p)),           # base_x
                pl.BlockSpec((1, p_tile), lambda b, p: (0, p)),           # base_y
                pl.BlockSpec((1, C, p_tile), lambda b, p: (b, 0, p)),     # im1 p-block
                pl.BlockSpec((1, C, p_tile), lambda b, p: (b, 0, p)),     # im2 p-block
                pl.BlockSpec((1, C * H, W), lambda b, p: (b, 0, 0)),      # im2 slab (per batch)
                pl.BlockSpec(memory_space=pltpu.MemorySpace.SMEM),        # w1 (2, C)
                pl.BlockSpec(memory_space=pltpu.MemorySpace.SMEM),        # w2 (2, C)
                pl.BlockSpec(memory_space=pltpu.MemorySpace.SMEM),        # bias (2,)
            ],
            out_specs=[
                pl.BlockSpec((1, 2, p_tile), lambda b, p: (b, 0, p)),     # flow
                pl.BlockSpec((1, 1, p_tile), lambda b, p: (b, 0, p)),     # conf
            ],
        ),
        compiler_params=pltpu.CompilerParams(
            dimension_semantics=("parallel", "parallel"),
            vmem_limit_bytes=32 * 1024 * 1024),
        cost_estimate=cost,
    )(base_x, base_y, im1f, im2f, im2s, w1s, w2s, bias)

    flow_up = flow_flat[:, :, :HW].reshape(B, 2, H, W)
    conf = conf_flat[:, :, :HW].reshape(B, 1, H, W)
    return flow_up, conf


if __name__ == "__main__":
    B, C, H, W = 2, 3, 16, 16

    key = jax.random.PRNGKey(0)
    k_im1, k_im2, k_w1, k_w2, k_b = jax.random.split(key, 5)

    im1 = jax.random.uniform(k_im1, (B, C, H, W), dtype=jnp.float32)
    im2 = jax.random.uniform(k_im2, (B, C, H, W), dtype=jnp.float32)

    # deterministic stand-in flow-predictor parameters (1x1 conv, 2*C -> 2)
    w1 = jax.random.normal(k_w1, (2, C), dtype=jnp.float32) * 1e-3
    w2 = jax.random.normal(k_w2, (2, C), dtype=jnp.float32) * 1e-3
    bias = jax.random.normal(k_b, (2,), dtype=jnp.float32) * 1e-1

    flow_up, conf = jax.jit(raft_forward)(im1, im2, w1, w2, bias)
    jax.block_until_ready((flow_up, conf))

    assert flow_up.shape == (B, 2, H, W) and flow_up.dtype == jnp.float32
    assert conf.shape == (B, 1, H, W) and conf.dtype == jnp.float32
    assert bool(jnp.all(jnp.isfinite(flow_up)))
    assert bool(jnp.all(jnp.isfinite(conf)))
    print("KERNEL_OK")
</pallas_src>

<mosaic_0001>
module attributes {stable_mosaic.version = 11 : i64} {
  func.func @_raft_kernel(%arg0: i32, %arg1: i32, %arg2: memref<1x256xf32, #tpu.memory_space<vmem>>, %arg3: memref<1x256xf32, #tpu.memory_space<vmem>>, %arg4: memref<1x3x256xf32, #tpu.memory_space<vmem>>, %arg5: memref<1x3x256xf32, #tpu.memory_space<vmem>>, %arg6: memref<1x48x16xf32, #tpu.memory_space<vmem>>, %arg7: memref<2x3xf32, #tpu.memory_space<smem>>, %arg8: memref<2x3xf32, #tpu.memory_space<smem>>, %arg9: memref<2xf32, #tpu.memory_space<smem>>, %arg10: memref<1x2x256xf32, #tpu.memory_space<vmem>>, %arg11: memref<1x1x256xf32, #tpu.memory_space<vmem>>) attributes {dimension_semantics = [#tpu.dimension_semantics<parallel>, #tpu.dimension_semantics<parallel>], iteration_bounds = array<i64: 2, 1>, scalar_prefetch = 0 : i64, scratch_operands = 0 : i64, tpu.core_type = #tpu.core_type<tc>, window_params = [{transform_indices = @transform_0, window_bounds = array<i64: 1, 256>}, {transform_indices = @transform_1, window_bounds = array<i64: 1, 256>}, {transform_indices = @transform_2, window_bounds = array<i64: 1, 3, 256>}, {transform_indices = @transform_3, window_bounds = array<i64: 1, 3, 256>}, {transform_indices = @transform_4, window_bounds = array<i64: 1, 48, 16>}, {transform_indices = @transform_5, window_bounds = array<i64: 2, 3>}, {transform_indices = @transform_6, window_bounds = array<i64: 2, 3>}, {transform_indices = @transform_7, window_bounds = array<i64: 2>}, {transform_indices = @transform_8, window_bounds = array<i64: 1, 2, 256>}, {transform_indices = @transform_9, window_bounds = array<i64: 1, 1, 256>}]} {
    %c0 = arith.constant 0 : index
    %c0_0 = arith.constant 0 : index
    %c0_1 = arith.constant 0 : index
    %0 = vector.load %arg4[%c0, %c0_0, %c0_1] : memref<1x3x256xf32, #tpu.memory_space<vmem>>, vector<1x3x256xf32>
    %1 = vector.shape_cast %0 : vector<1x3x256xf32> to vector<3x256xf32>
    %c0_2 = arith.constant 0 : index
    %c0_3 = arith.constant 0 : index
    %c0_4 = arith.constant 0 : index
    %2 = vector.load %arg5[%c0_2, %c0_3, %c0_4] : memref<1x3x256xf32, #tpu.memory_space<vmem>>, vector<1x3x256xf32>
    %3 = vector.shape_cast %2 : vector<1x3x256xf32> to vector<3x256xf32>
    %cst = arith.constant 0.000000e+00 : f32
    %4 = vector.broadcast %cst : f32 to vector<1x256xf32>
    %c0_5 = arith.constant 0 : index
    %5 = memref.load %arg9[%c0_5] : memref<2xf32, #tpu.memory_space<smem>>
    %6 = vector.broadcast %5 : f32 to vector<1x256xf32>
    %7 = arith.addf %4, %6 : vector<1x256xf32>
    %cst_6 = arith.constant 0.000000e+00 : f32
    %8 = vector.broadcast %cst_6 : f32 to vector<1x256xf32>
    %c1 = arith.constant 1 : index
    %9 = memref.load %arg9[%c1] : memref<2xf32, #tpu.memory_space<smem>>
    %10 = vector.broadcast %9 : f32 to vector<1x256xf32>
    %11 = arith.addf %8, %10 : vector<1x256xf32>
    %12 = vector.extract_strided_slice %1 {offsets = [0, 0], sizes = [1, 256], strides = [1, 1]} : vector<3x256xf32> to vector<1x256xf32>
    %13 = vector.extract_strided_slice %3 {offsets = [0, 0], sizes = [1, 256], strides = [1, 1]} : vector<3x256xf32> to vector<1x256xf32>
    %c0_7 = arith.constant 0 : index
    %c0_8 = arith.constant 0 : index
    %14 = memref.load %arg7[%c0_7, %c0_8] : memref<2x3xf32, #tpu.memory_space<smem>>
    %15 = vector.broadcast %14 : f32 to vector<1x256xf32>
    %16 = arith.mulf %15, %12 : vector<1x256xf32>
    %17 = arith.addf %7, %16 : vector<1x256xf32>
    %c0_9 = arith.constant 0 : index
    %c0_10 = arith.constant 0 : index
    %18 = memref.load %arg8[%c0_9, %c0_10] : memref<2x3xf32, #tpu.memory_space<smem>>
    %19 = vector.broadcast %18 : f32 to vector<1x256xf32>
    %20 = arith.mulf %19, %13 : vector<1x256xf32>
    %21 = arith.addf %17, %20 : vector<1x256xf32>
    %c1_11 = arith.constant 1 : index
    %c0_12 = arith.constant 0 : index
    %22 = memref.load %arg7[%c1_11, %c0_12] : memref<2x3xf32, #tpu.memory_space<smem>>
    %23 = vector.broadcast %22 : f32 to vector<1x256xf32>
    %24 = arith.mulf %23, %12 : vector<1x256xf32>
    %25 = arith.addf %11, %24 : vector<1x256xf32>
    %c1_13 = arith.constant 1 : index
    %c0_14 = arith.constant 0 : index
    %26 = memref.load %arg8[%c1_13, %c0_14] : memref<2x3xf32, #tpu.memory_space<smem>>
    %27 = vector.broadcast %26 : f32 to vector<1x256xf32>
    %28 = arith.mulf %27, %13 : vector<1x256xf32>
    %29 = arith.addf %25, %28 : vector<1x256xf32>
    %30 = vector.extract_strided_slice %1 {offsets = [1, 0], sizes = [1, 256], strides = [1, 1]} : vector<3x256xf32> to vector<1x256xf32>
    %31 = vector.extract_strided_slice %3 {offsets = [1, 0], sizes = [1, 256], strides = [1, 1]} : vector<3x256xf32> to vector<1x256xf32>
    %c0_15 = arith.constant 0 : index
    %c1_16 = arith.constant 1 : index
    %32 = memref.load %arg7[%c0_15, %c1_16] : memref<2x3xf32, #tpu.memory_space<smem>>
    %33 = vector.broadcast %32 : f32 to vector<1x256xf32>
    %34 = arith.mulf %33, %30 : vector<1x256xf32>
    %35 = arith.addf %21, %34 : vector<1x256xf32>
    %c0_17 = arith.constant 0 : index
    %c1_18 = arith.constant 1 : index
    %36 = memref.load %arg8[%c0_17, %c1_18] : memref<2x3xf32, #tpu.memory_space<smem>>
    %37 = vector.broadcast %36 : f32 to vector<1x256xf32>
    %38 = arith.mulf %37, %31 : vector<1x256xf32>
    %39 = arith.addf %35, %38 : vector<1x256xf32>
    %c1_19 = arith.constant 1 : index
    %c1_20 = arith.constant 1 : index
    %40 = memref.load %arg7[%c1_19, %c1_20] : memref<2x3xf32, #tpu.memory_space<smem>>
    %41 = vector.broadcast %40 : f32 to vector<1x256xf32>
    %42 = arith.mulf %41, %30 : vector<1x256xf32>
    %43 = arith.addf %29, %42 : vector<1x256xf32>
    %c1_21 = arith.constant 1 : index
    %c1_22 = arith.constant 1 : index
    %44 = memref.load %arg8[%c1_21, %c1_22] : memref<2x3xf32, #tpu.memory_space<smem>>
    %45 = vector.broadcast %44 : f32 to vector<1x256xf32>
    %46 = arith.mulf %45, %31 : vector<1x256xf32>
    %47 = arith.addf %43, %46 : vector<1x256xf32>
    %48 = vector.extract_strided_slice %1 {offsets = [2, 0], sizes = [1, 256], strides = [1, 1]} : vector<3x256xf32> to vector<1x256xf32>
    %49 = vector.extract_strided_slice %3 {offsets = [2, 0], sizes = [1, 256], strides = [1, 1]} : vector<3x256xf32> to vector<1x256xf32>
    %c0_23 = arith.constant 0 : index
    %c2 = arith.constant 2 : index
    %50 = memref.load %arg7[%c0_23, %c2] : memref<2x3xf32, #tpu.memory_space<smem>>
    %51 = vector.broadcast %50 : f32 to vector<1x256xf32>
    %52 = arith.mulf %51, %48 : vector<1x256xf32>
    %53 = arith.addf %39, %52 : vector<1x256xf32>
    %c0_24 = arith.constant 0 : index
    %c2_25 = arith.constant 2 : index
    %54 = memref.load %arg8[%c0_24, %c2_25] : memref<2x3xf32, #tpu.memory_space<smem>>
    %55 = vector.broadcast %54 : f32 to vector<1x256xf32>
    %56 = arith.mulf %55, %49 : vector<1x256xf32>
    %57 = arith.addf %53, %56 : vector<1x256xf32>
    %c1_26 = arith.constant 1 : index
    %c2_27 = arith.constant 2 : index
    %58 = memref.load %arg7[%c1_26, %c2_27] : memref<2x3xf32, #tpu.memory_space<smem>>
    %59 = vector.broadcast %58 : f32 to vector<1x256xf32>
    %60 = arith.mulf %59, %48 : vector<1x256xf32>
    %61 = arith.addf %47, %60 : vector<1x256xf32>
    %c1_28 = arith.constant 1 : index
    %c2_29 = arith.constant 2 : index
    %62 = memref.load %arg8[%c1_28, %c2_29] : memref<2x3xf32, #tpu.memory_space<smem>>
    %63 = vector.broadcast %62 : f32 to vector<1x256xf32>
    %64 = arith.mulf %63, %49 : vector<1x256xf32>
    %65 = arith.addf %61, %64 : vector<1x256xf32>
    %c0_30 = arith.constant 0 : index
    %c0_31 = arith.constant 0 : index
    %66 = vector.load %arg2[%c0_30, %c0_31] : memref<1x256xf32, #tpu.memory_space<vmem>>, vector<1x256xf32>
    %67 = arith.addf %66, %57 : vector<1x256xf32>
    %cst_32 = arith.constant 0.000000e+00 : f32
    %cst_33 = arith.constant 1.500000e+01 : f32
    %68 = vector.broadcast %cst_32 : f32 to vector<1x256xf32>
    %69 = arith.maximumf %68, %67 : vector<1x256xf32>
    %70 = vector.broadcast %cst_33 : f32 to vector<1x256xf32>
    %71 = arith.minimumf %70, %69 : vector<1x256xf32>
    %c0_34 = arith.constant 0 : index
    %c0_35 = arith.constant 0 : index
    %72 = vector.load %arg3[%c0_34, %c0_35] : memref<1x256xf32, #tpu.memory_space<vmem>>, vector<1x256xf32>
    %73 = arith.addf %72, %65 : vector<1x256xf32>
    %cst_36 = arith.constant 0.000000e+00 : f32
    %cst_37 = arith.constant 1.500000e+01 : f32
    %74 = vector.broadcast %cst_36 : f32 to vector<1x256xf32>
    %75 = arith.maximumf %74, %73 : vector<1x256xf32>
    %76 = vector.broadcast %cst_37 : f32 to vector<1x256xf32>
    %77 = arith.minimumf %76, %75 : vector<1x256xf32>
    %78 = math.floor %71 : vector<1x256xf32>
    %79 = math.floor %77 : vector<1x256xf32>
    %80 = arith.subf %71, %78 : vector<1x256xf32>
    %cst_38 = arith.constant 1.000000e+00 : f32
    %81 = vector.broadcast %cst_38 : f32 to vector<1x256xf32>
    %82 = arith.subf %81, %80 : vector<1x256xf32>
    %83 = arith.subf %77, %79 : vector<1x256xf32>
    %cst_39 = arith.constant 1.000000e+00 : f32
    %84 = vector.broadcast %cst_39 : f32 to vector<1x256xf32>
    %85 = arith.subf %84, %83 : vector<1x256xf32>
    %86 = arith.fptosi %78 : vector<1x256xf32> to vector<1x256xi32>
    %87 = arith.fptosi %79 : vector<1x256xf32> to vector<1x256xi32>
    %c1_i32 = arith.constant 1 : i32
    %88 = vector.broadcast %c1_i32 : i32 to vector<1x256xi32>
    %89 = arith.addi %86, %88 : vector<1x256xi32>
    %c15_i32 = arith.constant 15 : i32
    %90 = vector.broadcast %c15_i32 : i32 to vector<1x256xi32>
    %91 = arith.minsi %89, %90 : vector<1x256xi32>
    %c1_i32_40 = arith.constant 1 : i32
    %92 = vector.broadcast %c1_i32_40 : i32 to vector<1x256xi32>
    %93 = arith.addi %87, %92 : vector<1x256xi32>
    %c15_i32_41 = arith.constant 15 : i32
    %94 = vector.broadcast %c15_i32_41 : i32 to vector<1x256xi32>
    %95 = arith.minsi %93, %94 : vector<1x256xi32>
    %96 = tpu.iota {dimensions = array<i32: 0>} : vector<16x256xi32>
    %97 = vector.broadcast %86 : vector<1x256xi32> to vector<16x256xi32>
    %98 = arith.cmpi eq, %96, %97 : vector<16x256xi32>
    %99 = arith.extui %98 : vector<16x256xi1> to vector<16x256xi32>
    %100 = arith.sitofp %99 : vector<16x256xi32> to vector<16x256xf32>
    %101 = vector.broadcast %82 : vector<1x256xf32> to vector<16x256xf32>
    %102 = arith.mulf %100, %101 : vector<16x256xf32>
    %103 = vector.broadcast %91 : vector<1x256xi32> to vector<16x256xi32>
    %104 = arith.cmpi eq, %96, %103 : vector<16x256xi32>
    %105 = arith.extui %104 : vector<16x256xi1> to vector<16x256xi32>
    %106 = arith.sitofp %105 : vector<16x256xi32> to vector<16x256xf32>
    %107 = vector.broadcast %80 : vector<1x256xf32> to vector<16x256xf32>
    %108 = arith.mulf %106, %107 : vector<16x256xf32>
    %109 = arith.addf %102, %108 : vector<16x256xf32>
    %110 = tpu.iota {dimensions = array<i32: 0>} : vector<16x256xi32>
    %111 = vector.broadcast %87 : vector<1x256xi32> to vector<16x256xi32>
    %112 = arith.cmpi eq, %110, %111 : vector<16x256xi32>
    %113 = arith.extui %112 : vector<16x256xi1> to vector<16x256xi32>
    %114 = arith.sitofp %113 : vector<16x256xi32> to vector<16x256xf32>
    %115 = vector.broadcast %85 : vector<1x256xf32> to vector<16x256xf32>
    %116 = arith.mulf %114, %115 : vector<16x256xf32>
    %117 = vector.broadcast %95 : vector<1x256xi32> to vector<16x256xi32>
    %118 = arith.cmpi eq, %110, %117 : vector<16x256xi32>
    %119 = arith.extui %118 : vector<16x256xi1> to vector<16x256xi32>
    %120 = arith.sitofp %119 : vector<16x256xi32> to vector<16x256xf32>
    %121 = vector.broadcast %83 : vector<1x256xf32> to vector<16x256xf32>
    %122 = arith.mulf %120, %121 : vector<16x256xf32>
    %123 = arith.addf %116, %122 : vector<16x256xf32>
    %c0_42 = arith.constant 0 : index
    %c0_43 = arith.constant 0 : index
    %c0_44 = arith.constant 0 : index
    %124 = vector.load %arg6[%c0_42, %c0_43, %c0_44] : memref<1x48x16xf32, #tpu.memory_space<vmem>>, vector<1x48x16xf32>
    %125 = vector.shape_cast %124 : vector<1x48x16xf32> to vector<48x16xf32>
    %cst_45 = arith.constant dense<0.000000e+00> : vector<48x256xf32>
    %126 = tpu.matmul %125, %109, %cst_45 {dimension_numbers = #tpu.dot_dimension_numbers<[1], [0], [0], [1], [0, 0, 1, 1], [], []>} : vector<48x16xf32>, vector<16x256xf32>, vector<48x256xf32> -> vector<48x256xf32>
    %cst_46 = arith.constant 0.000000e+00 : f32
    %127 = vector.broadcast %cst_46 : f32 to vector<1x256xf32>
    %128 = vector.extract_strided_slice %126 {offsets = [0, 0], sizes = [16, 256], strides = [1, 1]} : vector<48x256xf32> to vector<16x256xf32>
    %129 = arith.mulf %128, %123 : vector<16x256xf32>
    %cst_47 = arith.constant dense<0.000000e+00> : vector<256xf32>
    %130 = vector.multi_reduction <add>, %129, %cst_47 [0] : vector<16x256xf32> to vector<256xf32>
    %131 = vector.shape_cast %130 : vector<256xf32> to vector<1x256xf32>
    %132 = vector.extract_strided_slice %1 {offsets = [0, 0], sizes = [1, 256], strides = [1, 1]} : vector<3x256xf32> to vector<1x256xf32>
    %133 = arith.subf %132, %131 : vector<1x256xf32>
    %134 = arith.mulf %133, %133 : vector<1x256xf32>
    %135 = arith.addf %127, %134 : vector<1x256xf32>
    %136 = vector.extract_strided_slice %126 {offsets = [16, 0], sizes = [16, 256], strides = [1, 1]} : vector<48x256xf32> to vector<16x256xf32>
    %137 = arith.mulf %136, %123 : vector<16x256xf32>
    %cst_48 = arith.constant dense<0.000000e+00> : vector<256xf32>
    %138 = vector.multi_reduction <add>, %137, %cst_48 [0] : vector<16x256xf32> to vector<256xf32>
    %139 = vector.shape_cast %138 : vector<256xf32> to vector<1x256xf32>
    %140 = vector.extract_strided_slice %1 {offsets = [1, 0], sizes = [1, 256], strides = [1, 1]} : vector<3x256xf32> to vector<1x256xf32>
    %141 = arith.subf %140, %139 : vector<1x256xf32>
    %142 = arith.mulf %141, %141 : vector<1x256xf32>
    %143 = arith.addf %135, %142 : vector<1x256xf32>
    %144 = vector.extract_strided_slice %126 {offsets = [32, 0], sizes = [16, 256], strides = [1, 1]} : vector<48x256xf32> to vector<16x256xf32>
    %145 = arith.mulf %144, %123 : vector<16x256xf32>
    %cst_49 = arith.constant dense<0.000000e+00> : vector<256xf32>
    %146 = vector.multi_reduction <add>, %145, %cst_49 [0] : vector<16x256xf32> to vector<256xf32>
    %147 = vector.shape_cast %146 : vector<256xf32> to vector<1x256xf32>
    %148 = vector.extract_strided_slice %1 {offsets = [2, 0], sizes = [1, 256], strides = [1, 1]} : vector<3x256xf32> to vector<1x256xf32>
    %149 = arith.subf %148, %147 : vector<1x256xf32>
    %150 = arith.mulf %149, %149 : vector<1x256xf32>
    %151 = arith.addf %143, %150 : vector<1x256xf32>
    %c0_50 = arith.constant 0 : index
    %c0_51 = arith.constant 0 : index
    %c0_52 = arith.constant 0 : index
    %152 = vector.load %arg10[%c0_50, %c0_51, %c0_52] : memref<1x2x256xf32, #tpu.memory_space<vmem>>, vector<1x1x256xf32>
    %153 = vector.shape_cast %152 : vector<1x1x256xf32> to vector<1x256xf32>
    %154 = vector.shape_cast %57 : vector<1x256xf32> to vector<1x1x256xf32>
    tpu.vector_store %arg10[%c0_50, %c0_51, %c0_52], %154 {strides = array<i32>} : memref<1x2x256xf32, #tpu.memory_space<vmem>>, vector<1x1x256xf32>,
    %c0_53 = arith.constant 0 : index
    %c1_54 = arith.constant 1 : index
    %c0_55 = arith.constant 0 : index
    %155 = vector.load %arg10[%c0_53, %c1_54, %c0_55] : memref<1x2x256xf32, #tpu.memory_space<vmem>>, vector<1x1x256xf32>
    %156 = vector.shape_cast %155 : vector<1x1x256xf32> to vector<1x256xf32>
    %157 = vector.shape_cast %65 : vector<1x256xf32> to vector<1x1x256xf32>
    tpu.vector_store %arg10[%c0_53, %c1_54, %c0_55], %157 {strides = array<i32>} : memref<1x2x256xf32, #tpu.memory_space<vmem>>, vector<1x1x256xf32>,
    %cst_56 = arith.constant 0.00999999977 : f32
    %158 = vector.broadcast %cst_56 : f32 to vector<1x256xf32>
    %159 = arith.cmpf olt, %151, %158 : vector<1x256xf32>
    %160 = arith.extui %159 : vector<1x256xi1> to vector<1x256xi32>
    %161 = arith.sitofp %160 : vector<1x256xi32> to vector<1x256xf32>
    %c0_57 = arith.constant 0 : index
    %c0_58 = arith.constant 0 : index
    %c0_59 = arith.constant 0 : index
    %162 = vector.load %arg11[%c0_57, %c0_58, %c0_59] : memref<1x1x256xf32, #tpu.memory_space<vmem>>, vector<1x1x256xf32>
    %163 = vector.shape_cast %162 : vector<1x1x256xf32> to vector<1x256xf32>
    %164 = vector.shape_cast %161 : vector<1x256xf32> to vector<1x1x256xf32>
    tpu.vector_store %arg11[%c0_57, %c0_58, %c0_59], %164 {strides = array<i32>} : memref<1x1x256xf32, #tpu.memory_space<vmem>>, vector<1x1x256xf32>,
    return
  }
  func.func @transform_0(%arg0: i32, %arg1: i32) -> (i32, i32) {
    %c0_i32 = arith.constant 0 : i32
    %c0_i32_0 = arith.constant 0 : i32
    return %c0_i32, %arg1 : i32, i32
  }
  func.func @transform_1(%arg0: i32, %arg1: i32) -> (i32, i32) {
    %c0_i32 = arith.constant 0 : i32
    %c0_i32_0 = arith.constant 0 : i32
    return %c0_i32, %arg1 : i32, i32
  }
  func.func @transform_2(%arg0: i32, %arg1: i32) -> (i32, i32, i32) {
    %c0_i32 = arith.constant 0 : i32
    %c0_i32_0 = arith.constant 0 : i32
    return %arg0, %c0_i32, %arg1 : i32, i32, i32
  }
  func.func @transform_3(%arg0: i32, %arg1: i32) -> (i32, i32, i32) {
    %c0_i32 = arith.constant 0 : i32
    %c0_i32_0 = arith.constant 0 : i32
    return %arg0, %c0_i32, %arg1 : i32, i32, i32
  }
  func.func @transform_4(%arg0: i32, %arg1: i32) -> (i32, i32, i32) {
    %c0_i32 = arith.constant 0 : i32
    %c0_i32_0 = arith.constant 0 : i32
    %c0_i32_1 = arith.constant 0 : i32
    return %arg0, %c0_i32, %c0_i32_0 : i32, i32, i32
  }
  func.func @transform_5(%arg0: i32, %arg1: i32) -> (i32, i32) {
    %c0_i32 = arith.constant 0 : i32
    %c0_i32_0 = arith.constant 0 : i32
    %c0_i32_1 = arith.constant 0 : i32
    return %c0_i32, %c0_i32_0 : i32, i32
  }
  func.func @transform_6(%arg0: i32, %arg1: i32) -> (i32, i32) {
    %c0_i32 = arith.constant 0 : i32
    %c0_i32_0 = arith.constant 0 : i32
    %c0_i32_1 = arith.constant 0 : i32
    return %c0_i32, %c0_i32_0 : i32, i32
  }
  func.func @transform_7(%arg0: i32, %arg1: i32) -> i32 {
    %c0_i32 = arith.constant 0 : i32
    %c0_i32_0 = arith.constant 0 : i32
    return %c0_i32 : i32
  }
  func.func @transform_8(%arg0: i32, %arg1: i32) -> (i32, i32, i32) {
    %c0_i32 = arith.constant 0 : i32
    %c0_i32_0 = arith.constant 0 : i32
    return %arg0, %c0_i32, %arg1 : i32, i32, i32
  }
  func.func @transform_9(%arg0: i32, %arg1: i32) -> (i32, i32, i32) {
    %c0_i32 = arith.constant 0 : i32
    %c0_i32_0 = arith.constant 0 : i32
    return %arg0, %c0_i32, %arg1 : i32, i32, i32
  }
}

</mosaic_0001>

<llo_original>
// kernel: raft_forward.1
$region0: #{raft_forward.1}
  #allocation0 [shape = 'u32[]', space=smem, size = 0x4, offset = 0x4, fixed_abs, tag = 'smem constant byte address 0x4 - core index']
  #allocation1 [shape = 'u32[144,128]{1,0:T(1,128)}', space=vmem, size = 0x12000, scoped, tag = 'internal scratch']
  %s0 = inlined_call_operand.vmem [shape: f32[1,256], index: 0, kind: input, shape index: {}]
  %s1 = inlined_call_operand.vmem [shape: f32[1,256], index: 1, kind: input, shape index: {}]
  %s2 = inlined_call_operand.vmem [shape: f32[2,3,256], index: 2, kind: input, shape index: {}]
  %s3 = inlined_call_operand.vmem [shape: f32[2,3,256], index: 3, kind: input, shape index: {}]
  %s4 = inlined_call_operand.vmem [shape: f32[2,48,16], index: 4, kind: input, shape index: {}]
  %s5 = inlined_call_operand.vmem [shape: f32[2,3], index: 5, kind: input, shape index: {}]
  %s6 = inlined_call_operand.vmem [shape: f32[2,3], index: 6, kind: input, shape index: {}]
  %s7 = inlined_call_operand.vmem [shape: f32[2], index: 7, kind: input, shape index: {}]
  %s8 = inlined_call_operand.vmem [shape: f32[2,2,256], index: 8, kind: output, shape index: {0}]
  %s9 = inlined_call_operand.vmem [shape: f32[2,1,256], index: 9, kind: output, shape index: {1}]
  %10 = xla_tuple %s8, %s9
  %s11 = sld [smem:[#allocation0]]
  $region85: #{raft_forward.1} parent=0
    _
  %s13 = ssub.s32 1, %s11
  %s14 = scalar_select 0, %s13, %s11
  $region1: #{raft_forward.1} parent=0
    #allocation2 [shape = 'u8[1024]{0}', space=smem, size = 0x400, scoped, tag = 'input window, operand 5, single buffered']
    #allocation3 [shape = 's32[2]{0}', space=sflag, size = 0x8, scoped, tag = 'scoped memory for raft_forward.1']
    #allocation4 [shape = 'u8[1024]{0}', space=smem, size = 0x400, scoped, tag = 'input window, operand 6, single buffered']
    #allocation5 [shape = 's32[1]{0}', space=sflag, size = 0x4, scoped, tag = 'scoped memory for raft_forward.1']
    #allocation6 [shape = 'u8[512]{0}', space=smem, size = 0x200, scoped, tag = 'input window, operand 7, single buffered']
    %15 = vsyncpa [#allocation3], 0
    %16 = vsyncpa [#allocation5], 0
    loop: start=0, step=1, limit=4
    $region2: #{raft_forward.1} parent=1 // loop_pre_header
      _
    $region3: #{raft_forward.1} parent=1 // loop_header
      %s18 = sphi 0, %s22
      %p19 = scmp.ge.s32.totalorder %s18, 4
      %s25 = sphi 0, %s37
      %s26 = sphi 0, %s33
      %s27 = sphi 0, %s25
      %s28 = sphi 0, %s26
      %s29 = sphi 0, %s27
      %s30 = sphi 0, %s28
      %s40 = sphi 0, %s42
      %s43 = sphi 0, %s40
      %s44 = sphi 0, %s43
      %s60 = sphi 0, %s44
      %s66 = sphi 0, %s68
      %s69 = sphi 0, %s66
      %s70 = sphi 0, %s69
      %s86 = sphi 0, %s70
      %s94 = sphi 0, %s96
      %s97 = sphi 0, %s94
      %s98 = sphi 0, %s97
      %s114 = sphi 0, %s98
      %s122 = sphi 0, %s124
      %s125 = sphi 0, %s122
      %s126 = sphi 0, %s125
      %s142 = sphi 0, %s126
      %s148 = sphi 0, %s150
      %s151 = sphi 0, %s148
      %s152 = sphi 0, %s151
      %s168 = sphi 0, %s152
      %s172 = sphi 0, %s172
      %s174 = sphi 0, %s172
      %s175 = sphi 0, %s174
      %s189 = sphi 0, %s175
      %s193 = sphi 0, %s193
      %s195 = sphi 0, %s193
      %s196 = sphi 0, %s195
      %s210 = sphi 0, %s196
      %s214 = sphi 0, %s214
      %s216 = sphi 0, %s214
      %s217 = sphi 0, %s216
      %s231 = sphi 0, %s217
      %s239 = sphi 0, %s241
      %s242 = sphi 0, %s239
      %s243 = sphi 0, %s242
      %s259 = sphi 0, %s243
      %s267 = sphi 0, %s269
      %s270 = sphi 0, %s267
      %s271 = sphi 0, %s270
      %s287 = sphi 0, %s271
    $region4: #{raft_forward.1} parent=1 // loop_header_branch
      %21 = sbr.rel (%p19) target = $region8
    $region5: #{raft_forward.1} parent=1 // loop_body
      %s23 = ssub.s32 %s18, 1
      %s24 = ssub.s32 %s18, 2
      %s31 = sadd.s32 1, %s26
      %p32 = scmp.ge.s32.totalorder %s31, 1
      %s33 = scalar_select %p32, 0, %s31
      %s34 = sadd.s32 1, %s25
      %s35 = scalar_select %p32, %s34, %s25
      %p36 = scmp.ge.s32.totalorder %s35, 2
      %s37 = scalar_select %p36, 0, %s35
      %s38 = ssub.s32 %s26, %s33
      %p39 = scmp.eq.s32.totalorder %s38, 0
      %s41 = sadd.s32 %s40, 1
      %s42 = scalar_select %p39, %s40, %s41
      %p45 = pneg %p39
      %p46 = scmp.eq.s32.totalorder %s18, 1
      %p47 = por %p45, %p46
      %p48 = scmp.ne.s32.totalorder %s40, %s43
      %p49 = scmp.eq.s32.totalorder %s18, 0
      %p50 = por %p48, %p49
      %p51 = scmp.ne.s32.totalorder %s40, %s43
      %p52 = scmp.eq.s32.totalorder %s23, 1
      %p53 = por %p51, %p52
      %p54 = scmp.ne.s32.totalorder %s43, %s44
      %p55 = scmp.eq.s32.totalorder %s23, 0
      %p56 = por %p54, %p55
      %p57 = scmp.ne.s32.totalorder %s43, %s44
      %p58 = scmp.eq.s32.totalorder %s24, 1
      %p59 = por %p57, %p58
      %p61 = scmp.ne.s32.totalorder %s44, %s60
      %p62 = scmp.eq.s32.totalorder %s24, 0
      %p63 = por %p61, %p62
      %s64 = ssub.s32 %s26, %s33
      %p65 = scmp.eq.s32.totalorder %s64, 0
      %s67 = sadd.s32 %s66, 1
      %s68 = scalar_select %p65, %s66, %s67
      %p71 = pneg %p65
      %p72 = scmp.eq.s32.totalorder %s18, 1
      %p73 = por %p71, %p72
      %p74 = scmp.ne.s32.totalorder %s66, %s69
      %p75 = scmp.eq.s32.totalorder %s18, 0
      %p76 = por %p74, %p75
      %p77 = scmp.ne.s32.totalorder %s66, %s69
      %p78 = scmp.eq.s32.totalorder %s23, 1
      %p79 = por %p77, %p78
      %p80 = scmp.ne.s32.totalorder %s69, %s70
      %p81 = scmp.eq.s32.totalorder %s23, 0
      %p82 = por %p80, %p81
      %p83 = scmp.ne.s32.totalorder %s69, %s70
      %p84 = scmp.eq.s32.totalorder %s24, 1
      %p85 = por %p83, %p84
      %p87 = scmp.ne.s32.totalorder %s70, %s86
      %p88 = scmp.eq.s32.totalorder %s24, 0
      %p89 = por %p87, %p88
      %s90 = ssub.s32 %s25, %s37
      %s91 = ssub.s32 %s26, %s33
      %s92 = sor.u32 %s90, %s91
      %p93 = scmp.eq.s32.totalorder %s92, 0
      %s95 = sadd.s32 %s94, 1
      %s96 = scalar_select %p93, %s94, %s95
      %p99 = pneg %p93
      %p100 = scmp.eq.s32.totalorder %s18, 1
      %p101 = por %p99, %p100
      %p102 = scmp.ne.s32.totalorder %s94, %s97
      %p103 = scmp.eq.s32.totalorder %s18, 0
      %p104 = por %p102, %p103
      %p105 = scmp.ne.s32.totalorder %s94, %s97
      %p106 = scmp.eq.s32.totalorder %s23, 1
      %p107 = por %p105, %p106
      %p108 = scmp.ne.s32.totalorder %s97, %s98
      %p109 = scmp.eq.s32.totalorder %s23, 0
      %p110 = por %p108, %p109
      %p111 = scmp.ne.s32.totalorder %s97, %s98
      %p112 = scmp.eq.s32.totalorder %s24, 1
      %p113 = por %p111, %p112
      %p115 = scmp.ne.s32.totalorder %s98, %s114
      %p116 = scmp.eq.s32.totalorder %s24, 0
      %p117 = por %p115, %p116
      %s118 = ssub.s32 %s25, %s37
      %s119 = ssub.s32 %s26, %s33
      %s120 = sor.u32 %s118, %s119
      %p121 = scmp.eq.s32.totalorder %s120, 0
      %s123 = sadd.s32 %s122, 1
      %s124 = scalar_select %p121, %s122, %s123
      %p127 = pneg %p121
      %p128 = scmp.eq.s32.totalorder %s18, 1
      %p129 = por %p127, %p128
      %p130 = scmp.ne.s32.totalorder %s122, %s125
      %p131 = scmp.eq.s32.totalorder %s18, 0
      %p132 = por %p130, %p131
      %p133 = scmp.ne.s32.totalorder %s122, %s125
      %p134 = scmp.eq.s32.totalorder %s23, 1
      %p135 = por %p133, %p134
      %p136 = scmp.ne.s32.totalorder %s125, %s126
      %p137 = scmp.eq.s32.totalorder %s23, 0
      %p138 = por %p136, %p137
      %p139 = scmp.ne.s32.totalorder %s125, %s126
      %p140 = scmp.eq.s32.totalorder %s24, 1
      %p141 = por %p139, %p140
      %p143 = scmp.ne.s32.totalorder %s126, %s142
      %p144 = scmp.eq.s32.totalorder %s24, 0
      %p145 = por %p143, %p144
      %s146 = ssub.s32 %s25, %s37
      %p147 = scmp.eq.s32.totalorder %s146, 0
      %s149 = sadd.s32 %s148, 1
      %s150 = scalar_select %p147, %s148, %s149
      %p153 = pneg %p147
      %p154 = scmp.eq.s32.totalorder %s18, 1
      %p155 = por %p153, %p154
      %p156 = scmp.ne.s32.totalorder %s148, %s151
      %p157 = scmp.eq.s32.totalorder %s18, 0
      %p158 = por %p156, %p157
      %p159 = scmp.ne.s32.totalorder %s148, %s151
      %p160 = scmp.eq.s32.totalorder %s23, 1
      %p161 = por %p159, %p160
      %p162 = scmp.ne.s32.totalorder %s151, %s152
      %p163 = scmp.eq.s32.totalorder %s23, 0
      %p164 = por %p162, %p163
      %p165 = scmp.ne.s32.totalorder %s151, %s152
      %p166 = scmp.eq.s32.totalorder %s24, 1
      %p167 = por %p165, %p166
      %p169 = scmp.ne.s32.totalorder %s152, %s168
      %p170 = scmp.eq.s32.totalorder %s24, 0
      %p171 = por %p169, %p170
      %s173 = sadd.s32 %s172, 1
      %p176 = scmp.eq.s32.totalorder %s18, 1
      %p177 = scmp.ne.s32.totalorder %s172, %s174
      %p178 = scmp.eq.s32.totalorder %s18, 0
      %p179 = por %p177, %p178
      %p180 = scmp.ne.s32.totalorder %s172, %s174
      %p181 = scmp.eq.s32.totalorder %s23, 1
      %p182 = por %p180, %p181
      %p183 = scmp.ne.s32.totalorder %s174, %s175
      %p184 = scmp.eq.s32.totalorder %s23, 0
      %p185 = por %p183, %p184
      %p186 = scmp.ne.s32.totalorder %s174, %s175
      %p187 = scmp.eq.s32.totalorder %s24, 1
      %p188 = por %p186, %p187
      %p190 = scmp.ne.s32.totalorder %s175, %s189
      %p191 = scmp.eq.s32.totalorder %s24, 0
      %p192 = por %p190, %p191
      %s194 = sadd.s32 %s193, 1
      %p197 = scmp.eq.s32.totalorder %s18, 1
      %p198 = scmp.ne.s32.totalorder %s193, %s195
      %p199 = scmp.eq.s32.totalorder %s18, 0
      %p200 = por %p198, %p199
      %p201 = scmp.ne.s32.totalorder %s193, %s195
      %p202 = scmp.eq.s32.totalorder %s23, 1
      %p203 = por %p201, %p202
      %p204 = scmp.ne.s32.totalorder %s195, %s196
      %p205 = scmp.eq.s32.totalorder %s23, 0
      %p206 = por %p204, %p205
      %p207 = scmp.ne.s32.totalorder %s195, %s196
      %p208 = scmp.eq.s32.totalorder %s24, 1
      %p209 = por %p207, %p208
      %p211 = scmp.ne.s32.totalorder %s196, %s210
      %p212 = scmp.eq.s32.totalorder %s24, 0
      %p213 = por %p211, %p212
      %s215 = sadd.s32 %s214, 1
      %p218 = scmp.eq.s32.totalorder %s18, 1
      %p219 = scmp.ne.s32.totalorder %s214, %s216
      %p220 = scmp.eq.s32.totalorder %s18, 0
      %p221 = por %p219, %p220
      %p222 = scmp.ne.s32.totalorder %s214, %s216
      %p223 = scmp.eq.s32.totalorder %s23, 1
      %p224 = por %p222, %p223
      %p225 = scmp.ne.s32.totalorder %s216, %s217
      %p226 = scmp.eq.s32.totalorder %s23, 0
      %p227 = por %p225, %p226
      %p228 = scmp.ne.s32.totalorder %s216, %s217
      %p229 = scmp.eq.s32.totalorder %s24, 1
      %p230 = por %p228, %p229
      %p232 = scmp.ne.s32.totalorder %s217, %s231
      %p233 = scmp.eq.s32.totalorder %s24, 0
      %p234 = por %p232, %p233
      %s235 = ssub.s32 %s25, %s37
      %s236 = ssub.s32 %s26, %s33
      %s237 = sor.u32 %s235, %s236
      %p238 = scmp.eq.s32.totalorder %s237, 0
      %s240 = sadd.s32 %s239, 1
      %s241 = scalar_select %p238, %s239, %s240
      %p244 = pneg %p238
      %p245 = scmp.eq.s32.totalorder %s18, 1
      %p246 = por %p244, %p245
      %p247 = scmp.ne.s32.totalorder %s239, %s242
      %p248 = scmp.eq.s32.totalorder %s18, 0
      %p249 = por %p247, %p248
      %p250 = scmp.ne.s32.totalorder %s239, %s242
      %p251 = scmp.eq.s32.totalorder %s23, 1
      %p252 = por %p250, %p251
      %p253 = scmp.ne.s32.totalorder %s242, %s243
      %p254 = scmp.eq.s32.totalorder %s23, 0
      %p255 = por %p253, %p254
      %p256 = scmp.ne.s32.totalorder %s242, %s243
      %p257 = scmp.eq.s32.totalorder %s24, 1
      %p258 = por %p256, %p257
      %p260 = scmp.ne.s32.totalorder %s243, %s259
      %p261 = scmp.eq.s32.totalorder %s24, 0
      %p262 = por %p260, %p261
      %s263 = ssub.s32 %s25, %s37
      %s264 = ssub.s32 %s26, %s33
      %s265 = sor.u32 %s263, %s264
      %p266 = scmp.eq.s32.totalorder %s265, 0
      %s268 = sadd.s32 %s267, 1
      %s269 = scalar_select %p266, %s267, %s268
      %p272 = pneg %p266
      %p273 = scmp.eq.s32.totalorder %s18, 1
      %p274 = por %p272, %p273
      %p275 = scmp.ne.s32.totalorder %s267, %s270
      %p276 = scmp.eq.s32.totalorder %s18, 0
      %p277 = por %p275, %p276
      %p278 = scmp.ne.s32.totalorder %s267, %s270
      %p279 = scmp.eq.s32.totalorder %s23, 1
      %p280 = por %p278, %p279
      %p281 = scmp.ne.s32.totalorder %s270, %s271
      %p282 = scmp.eq.s32.totalorder %s23, 0
      %p283 = por %p281, %p282
      %p284 = scmp.ne.s32.totalorder %s270, %s271
      %p285 = scmp.eq.s32.totalorder %s24, 1
      %p286 = por %p284, %p285
      %p288 = scmp.ne.s32.totalorder %s271, %s287
      %p289 = scmp.eq.s32.totalorder %s24, 0
      %p290 = por %p288, %p289
      %p291 = scmp.le.s32.totalorder 1, %s18
      %p292 = scmp.lt.s32.totalorder %s18, 3
      %p293 = pnand %p291, %p292
      %p294 = pneg %p293
      // Predicated region
      $region9: #{raft_forward.1} parent=5 // pred_check
        _
      $region10: #{raft_forward.1} parent=5 // pred_check_branch
        %296 = sbr.rel (%p293) target = $region12
      $region11: #{raft_forward.1} parent=5 // pred_region
        %s297 = ssub.s32 %s18, 1
        // Predicated region
        $region13: #{raft_forward.1} parent=11 // pred_check
          %p298 = pneg %p56
        $region14: #{raft_forward.1} parent=11 // pred_check_branch
          %300 = sbr.rel (%p298) target = $region16
        $region15: #{raft_forward.1} parent=11 // pred_region
          %s301 = smul.u32 2, %s28
          %p302 = scmp.lt.s32.totalorder %s301, 1
          %s303 = scalar_select %p302, %s301, 1
          %s304 = scalar_lea.vmem %s0, %s303
          %s305 = smul.u32 2, %s28
        $region16: #{raft_forward.1} parent=11 // pred_fallthru
          _
        // Predicated region
        $region17: #{raft_forward.1} parent=11 // pred_check
          %p306 = pneg %p82
        $region18: #{raft_forward.1} parent=11 // pred_check_branch
          %308 = sbr.rel (%p306) target = $region20
        $region19: #{raft_forward.1} parent=11 // pred_region
          %s309 = smul.u32 2, %s28
          %p310 = scmp.lt.s32.totalorder %s309, 1
          %s311 = scalar_select %p310, %s309, 1
          %s312 = scalar_lea.vmem %s1, %s311
          %s313 = smul.u32 2, %s28
        $region20: #{raft_forward.1} parent=11 // pred_fallthru
          _
        // Predicated region
        $region21: #{raft_forward.1} parent=11 // pred_check
          %p314 = pneg %p185
        $region22: #{raft_forward.1} parent=11 // pred_check_branch
          %316 = sbr.rel (%p314) target = $region24
        $region23: #{raft_forward.1} parent=11 // pred_region
          %s318 = ssub.s32 32, 32
          %319 = vsyncadd [#allocation3], %s318
          %s321 = sshll.u32 %s5, 4
          %s322 = int_to_ptr.vmem [resolvable:$true] %s321
          %324 = dma.vmem_to_smem %s322, 32, [#allocation2], [#allocation3]
        $region24: #{raft_forward.1} parent=11 // pred_fallthru
          _
        // Predicated region
        $region25: #{raft_forward.1} parent=11 // pred_check
          %p325 = pneg %p206
        $region26: #{raft_forward.1} parent=11 // pred_check_branch
          %327 = sbr.rel (%p325) target = $region28
        $region27: #{raft_forward.1} parent=11 // pred_region
          %s329 = ssub.s32 32, 32
          %330 = vsyncadd [#allocation5], %s329
          %s332 = sshll.u32 %s6, 4
          %s333 = int_to_ptr.vmem [resolvable:$true] %s332
          %335 = dma.vmem_to_smem %s333, 32, [#allocation4], [#allocation5]
        $region28: #{raft_forward.1} parent=11 // pred_fallthru
          _
        // Predicated region
        $region29: #{raft_forward.1} parent=11 // pred_check
          %p336 = pneg %p227
        $region30: #{raft_forward.1} parent=11 // pred_check_branch
          %338 = sbr.rel (%p336) target = $region32
        $region31: #{raft_forward.1} parent=11 // pred_region
          %s340 = ssub.s32 16, 16
          %341 = vsyncadd [#allocation5], %s340
          %s343 = sshll.u32 %s7, 4
          %s344 = int_to_ptr.vmem [resolvable:$true] %s343
          %346 = dma.vmem_to_smem %s344, 16, [#allocation6], [#allocation5]
        $region32: #{raft_forward.1} parent=11 // pred_fallthru
          _
      $region12: #{raft_forward.1} parent=5 // pred_fallthru
        _
      %p347 = scmp.lt.s32.totalorder %s18, 2
      // Predicated region
      $region33: #{raft_forward.1} parent=5 // pred_check
        %p348 = pneg %p347
      $region34: #{raft_forward.1} parent=5 // pred_check_branch
        %350 = sbr.rel (%p348) target = $region36
      $region35: #{raft_forward.1} parent=5 // pred_region
        // Predicated region
        $region37: #{raft_forward.1} parent=35 // pred_check
          %p351 = pneg %p104
        $region38: #{raft_forward.1} parent=35 // pred_check_branch
          %353 = sbr.rel (%p351) target = $region40
        $region39: #{raft_forward.1} parent=35 // pred_region
          %s354 = smul.u32 2, %s26
          %p355 = scmp.lt.s32.totalorder %s25, 1
          %s356 = scalar_select %p355, %s25, 1
          %p357 = scmp.lt.s32.totalorder %s354, 1
          %s358 = scalar_select %p357, %s354, 1
          %s359 = smul.addr %s356, 2
          %s360 = sadd.s32 %s358, %s359
          %s361 = smul.addr %s360, 4
          %s362 = scalar_lea.vmem %s2, %s361
          %s363 = smul.u32 2, %s26
        $region40: #{raft_forward.1} parent=35 // pred_fallthru
          _
        // Predicated region
        $region41: #{raft_forward.1} parent=35 // pred_check
          %p364 = pneg %p132
        $region42: #{raft_forward.1} parent=35 // pred_check_branch
          %366 = sbr.rel (%p364) target = $region44
        $region43: #{raft_forward.1} parent=35 // pred_region
          %s367 = smul.u32 2, %s26
          %p368 = scmp.lt.s32.totalorder %s25, 1
          %s369 = scalar_select %p368, %s25, 1
          %p370 = scmp.lt.s32.totalorder %s367, 1
          %s371 = scalar_select %p370, %s367, 1
          %s372 = smul.addr %s369, 2
          %s373 = sadd.s32 %s371, %s372
          %s374 = smul.addr %s373, 4
          %s375 = scalar_lea.vmem %s3, %s374
          %s376 = smul.u32 2, %s26
        $region44: #{raft_forward.1} parent=35 // pred_fallthru
          _
        // Predicated region
        $region45: #{raft_forward.1} parent=35 // pred_check
          %p377 = pneg %p158
        $region46: #{raft_forward.1} parent=35 // pred_check_branch
          %379 = sbr.rel (%p377) target = $region48
        $region47: #{raft_forward.1} parent=35 // pred_region
          %p380 = scmp.lt.s32.totalorder %s25, 1
          %s381 = scalar_select %p380, %s25, 1
          %s382 = smul.addr %s381, 6
          %s383 = smul.addr %s382, 8
          %s384 = scalar_lea.vmem %s4, %s383
        $region48: #{raft_forward.1} parent=35 // pred_fallthru
          _
      $region36: #{raft_forward.1} parent=5 // pred_fallthru
        _
      %p385 = scmp.le.s32.totalorder 1, %s18
      %p386 = scmp.lt.s32.totalorder %s18, 3
      %p387 = pnand %p385, %p386
      %p388 = pneg %p387
      // Predicated region
      $region49: #{raft_forward.1} parent=5 // pred_check
        _
      $region50: #{raft_forward.1} parent=5 // pred_check_branch
        %390 = sbr.rel (%p387) target = $region52
      $region51: #{raft_forward.1} parent=5 // pred_region
        %s391 = ssub.s32 %s18, 1
        // Predicated region
        $region53: #{raft_forward.1} parent=51 // pred_check
          %p392 = pneg %p185
        $region54: #{raft_forward.1} parent=51 // pred_check_branch
          %394 = sbr.rel (%p392) target = $region56
        $region55: #{raft_forward.1} parent=51 // pred_region
          %395 = dma.done [#allocation3], 32
        $region56: #{raft_forward.1} parent=51 // pred_fallthru
          _
        // Predicated region
        $region57: #{raft_forward.1} parent=51 // pred_check
          %p396 = pneg %p206
        $region58: #{raft_forward.1} parent=51 // pred_check_branch
          %398 = sbr.rel (%p396) target = $region60
        $region59: #{raft_forward.1} parent=51 // pred_region
          %399 = dma.done [#allocation5], 32
        $region60: #{raft_forward.1} parent=51 // pred_fallthru
          _
        // Predicated region
        $region61: #{raft_forward.1} parent=51 // pred_check
          %p400 = pneg %p227
        $region62: #{raft_forward.1} parent=51 // pred_check_branch
          %402 = sbr.rel (%p400) target = $region64
        $region63: #{raft_forward.1} parent=51 // pred_region
          %403 = dma.done [#allocation5], 16
        $region64: #{raft_forward.1} parent=51 // pred_fallthru
          _
        %404 = sfence
        %s405 = smul.u32 2, %s28
        %p406 = scmp.lt.s32.totalorder %s405, 1
        %s407 = scalar_select %p406, %s405, 1
        %s408 = scalar_lea.vmem %s0, %s407
        %p409 = pneg %p56
        %p410 = pneg %p53
        %s411 = smul.u32 2, %s28
        %p412 = scmp.lt.s32.totalorder %s411, 1
        %s413 = scalar_select %p412, %s411, 1
        %s414 = scalar_lea.vmem %s1, %s413
        %p415 = pneg %p82
        %p416 = pneg %p79
        %s417 = smul.u32 2, %s28
        %p418 = scmp.lt.s32.totalorder %s27, 1
        %s419 = scalar_select %p418, %s27, 1
        %p420 = scmp.lt.s32.totalorder %s417, 1
        %s421 = scalar_select %p420, %s417, 1
        %s422 = smul.addr %s419, 2
        %s423 = sadd.s32 %s421, %s422
        %s424 = smul.addr %s423, 4
        %s425 = scalar_lea.vmem %s2, %s424
        %p426 = pneg %p110
        %p427 = pneg %p107
        %s428 = smul.u32 2, %s28
        %p429 = scmp.lt.s32.totalorder %s27, 1
        %s430 = scalar_select %p429, %s27, 1
        %p431 = scmp.lt.s32.totalorder %s428, 1
        %s432 = scalar_select %p431, %s428, 1
        %s433 = smul.addr %s430, 2
        %s434 = sadd.s32 %s432, %s433
        %s435 = smul.addr %s434, 4
        %s436 = scalar_lea.vmem %s3, %s435
        %p437 = pneg %p138
        %p438 = pneg %p135
        %p439 = scmp.lt.s32.totalorder %s27, 1
        %s440 = scalar_select %p439, %s27, 1
        %s441 = smul.addr %s440, 6
        %s442 = smul.addr %s441, 8
        %s443 = scalar_lea.vmem %s4, %s442
        %p444 = pneg %p164
        %p445 = pneg %p161
        %p446 = pneg %p185
        %p447 = pneg %p182
        %p448 = pneg %p206
        %p449 = pneg %p203
        %p450 = pneg %p227
        %p451 = pneg %p224
        %p452 = pneg %p255
        %p453 = pneg %p252
        %s454 = smul.u32 2, %s28
        %p455 = scmp.lt.s32.totalorder %s27, 1
        %s456 = scalar_select %p455, %s27, 1
        %p457 = scmp.lt.s32.totalorder %s454, 1
        %s458 = scalar_select %p457, %s454, 1
        %s459 = smul.addr %s456, 2
        %s460 = sadd.s32 %s458, %s459
        %s461 = smul.addr %s460, 2
        %s462 = scalar_lea.vmem %s8, %s461
        %p463 = pneg %p283
        %p464 = pneg %p280
        %s465 = smul.u32 2, %s28
        %p466 = scmp.lt.s32.totalorder %s27, 1
        %s467 = scalar_select %p466, %s27, 1
        %p468 = scmp.lt.s32.totalorder %s465, 1
        %s469 = scalar_select %p468, %s465, 1
        %s470 = smul.addr %s467, 2
        %s471 = sadd.s32 %s469, %s470
        %s472 = scalar_lea.vmem %s9, %s471
        %s473 = smul.u32 2, %s28
        %p474 = scmp.lt.s32.totalorder %s473, 1
        %s475 = scalar_select %p474, %s473, 1
        %s476 = scalar_lea.vmem %s0, %s475
        %s477 = smul.u32 2, %s28
        %s478 = smul.u32 2, %s28
        %p479 = scmp.lt.s32.totalorder %s478, 1
        %s480 = scalar_select %p479, %s478, 1
        %s481 = scalar_lea.vmem %s1, %s480
        %s482 = smul.u32 2, %s28
        %s483 = smul.u32 2, %s28
        %p484 = scmp.lt.s32.totalorder %s27, 1
        %s485 = scalar_select %p484, %s27, 1
        %p486 = scmp.lt.s32.totalorder %s483, 1
        %s487 = scalar_select %p486, %s483, 1
        %s488 = smul.addr %s485, 2
        %s489 = sadd.s32 %s487, %s488
        %s490 = smul.addr %s489, 4
        %s491 = scalar_lea.vmem %s2, %s490
        %s492 = smul.u32 2, %s28
        %s493 = smul.u32 2, %s28
        %p494 = scmp.lt.s32.totalorder %s27, 1
        %s495 = scalar_select %p494, %s27, 1
        %p496 = scmp.lt.s32.totalorder %s493, 1
        %s497 = scalar_select %p496, %s493, 1
        %s498 = smul.addr %s495, 2
        %s499 = sadd.s32 %s497, %s498
        %s500 = smul.addr %s499, 4
        %s501 = scalar_lea.vmem %s3, %s500
        %s502 = smul.u32 2, %s28
        %p503 = scmp.lt.s32.totalorder %s27, 1
        %s504 = scalar_select %p503, %s27, 1
        %s505 = smul.addr %s504, 6
        %s506 = smul.addr %s505, 8
        %s507 = scalar_lea.vmem %s4, %s506
        %s508 = smul.u32 2, %s28
        %p509 = scmp.lt.s32.totalorder %s27, 1
        %s510 = scalar_select %p509, %s27, 1
        %p511 = scmp.lt.s32.totalorder %s508, 1
        %s512 = scalar_select %p511, %s508, 1
        %s513 = smul.addr %s510, 2
        %s514 = sadd.s32 %s512, %s513
        %s515 = smul.addr %s514, 2
        %s516 = scalar_lea.vmem %s8, %s515
        %s517 = smul.u32 2, %s28
        %s518 = smul.u32 2, %s28
        %p519 = scmp.lt.s32.totalorder %s27, 1
        %s520 = scalar_select %p519, %s27, 1
        %p521 = scmp.lt.s32.totalorder %s518, 1
        %s522 = scalar_select %p521, %s518, 1
        %s523 = smul.addr %s520, 2
        %s524 = sadd.s32 %s522, %s523
        %s525 = scalar_lea.vmem %s9, %s524
        %s526 = smul.u32 2, %s28
        %v527 = vld [vmem:[%s491] sm:$0x77]
        %v528 = vld [vmem:[%s501] sm:$0x77]
        %s529 = sld [smem:[#allocation6]]
        %v530 = vstv %s529
        %v531 = vadd.f32 %v530, 0.0
        %s532 = sld [smem:[#allocation6 + $0x1]]
        %v533 = vstv %s532
        %v534 = vadd.f32 %v533, 0.0
        %s535 = sld [smem:[#allocation2]]
        %v536 = vstv %s535
        %v537 = vmul.f32 %v536, %v527
        %v538 = vadd.f32 %v531, %v537
        %s539 = sld [smem:[#allocation4]]
        %v540 = vstv %s539
        %v541 = vmul.f32 %v540, %v528
        %v542 = vadd.f32 %v538, %v541
        %s543 = sld [smem:[#allocation2 + $0x80]]
        %v544 = vstv %s543
        %v545 = vmul.f32 %v544, %v527
        %v546 = vadd.f32 %v534, %v545
        %s547 = sld [smem:[#allocation4 + $0x80]]
        %v548 = vstv %s547
        %v549 = vmul.f32 %v548, %v528
        %v550 = vadd.f32 %v546, %v549
        %s551 = sld [smem:[#allocation2 + $0x1]]
        %v552 = vstv %s551
        %v553 = vmul.f32 %v552, %v527
        %v555 = vrot.slane %v553, 5
        %v556 = vrot.slane %v555, 4
        %v558 = vadd.f32 %v542, %v556
        %s559 = sld [smem:[#allocation4 + $0x1]]
        %v560 = vstv %s559
        %v561 = vmul.f32 %v560, %v528
        %v563 = vrot.slane %v561, 5
        %v564 = vrot.slane %v563, 4
        %v566 = vadd.f32 %v558, %v564
        %s567 = sld [smem:[#allocation2 + $0x81]]
        %v568 = vstv %s567
        %v569 = vmul.f32 %v568, %v527
        %v571 = vrot.slane %v569, 5
        %v572 = vrot.slane %v571, 4
        %v574 = vadd.f32 %v550, %v572
        %s575 = sld [smem:[#allocation4 + $0x81]]
        %v576 = vstv %s575
        %v577 = vmul.f32 %v576, %v528
        %v579 = vrot.slane %v577, 5
        %v580 = vrot.slane %v579, 4
        %v582 = vadd.f32 %v574, %v580
        %s583 = sld [smem:[#allocation2 + $0x2]]
        %v584 = vstv %s583
        %v585 = vmul.f32 %v584, %v527
        %v587 = vrot.slane %v585, 6
        %v588 = vrot.slane %v587, 4
        %v590 = vadd.f32 %v566, %v588
        %s591 = sld [smem:[#allocation4 + $0x2]]
        %v592 = vstv %s591
        %v593 = vmul.f32 %v592, %v528
        %v595 = vrot.slane %v593, 6
        %v596 = vrot.slane %v595, 4
        %v598 = vadd.f32 %v590, %v596
        %s599 = sld [smem:[#allocation2 + $0x82]]
        %v600 = vstv %s599
        %v601 = vmul.f32 %v600, %v527
        %v603 = vrot.slane %v601, 6
        %v604 = vrot.slane %v603, 4
        %v606 = vadd.f32 %v582, %v604
        %s607 = sld [smem:[#allocation4 + $0x82]]
        %v608 = vstv %s607
        %v609 = vmul.f32 %v608, %v528
        %v611 = vrot.slane %v609, 6
        %v612 = vrot.slane %v611, 4
        %v614 = vadd.f32 %v606, %v612
        %v615 = vld [vmem:[%s476] sm:$0x3]
        %v618 = vunpack.c.l.s4 1966171168
        %v619 = vunpack.c.0.s8 %v618
        %v620 = vlaneseq
        %v621 = vshrl.u32 %v620, 7
        %v622 = vsub.s32 %v619, %v621
        %v623 = vrot.slane %v598, %v622
        %v625 = vunpack.c.l.s4 1966171168
        %v626 = vunpack.c.0.s8 %v625
        %v627 = vlaneseq
        %v628 = vshrl.u32 %v627, 7
        %v629 = vsub.s32 %v626, %v628
        %v630 = vrot.slane %v623, %v629
        %v632 = vadd.f32 %v615, %v630
        %v633 = vmax.f32 %v632, 0.0
        %v634 = vmin.f32 %v633, 15.0
        %v635 = vld [vmem:[%s481] sm:$0x3]
        %v638 = vunpack.c.l.s4 1966171168
        %v639 = vunpack.c.0.s8 %v638
        %v640 = vlaneseq
        %v641 = vshrl.u32 %v640, 7
        %v642 = vsub.s32 %v639, %v641
        %v643 = vrot.slane %v614, %v642
        %v645 = vunpack.c.l.s4 1966171168
        %v646 = vunpack.c.0.s8 %v645
        %v647 = vlaneseq
        %v648 = vshrl.u32 %v647, 7
        %v649 = vsub.s32 %v646, %v648
        %v650 = vrot.slane %v643, %v649
        %v652 = vadd.f32 %v635, %v650
        %v653 = vmax.f32 %v652, 0.0
        %v654 = vmin.f32 %v653, 15.0
        %v655 = vfloor.f32 %v634
        %v656 = vfloor.f32 %v654
        %v657 = vsub.f32 %v634, %v655
        %v658 = vsub.f32 1.0, %v657
        %v659 = vsub.f32 %v654, %v656
        %v660 = vsub.f32 1.0, %v659
        %v661 = vcvt.f32.s32.to.zero.pseudo %v655
        %v662 = vcvt.f32.s32.to.zero.pseudo %v656
        %v663 = vadd.s32 %v661, 1
        %vm664 = vcmp.lt.s32.totalorder %v663, 15
        %v665 = vsel %vm664, %v663, 15
        %v666 = vadd.s32 %v662, 1
        %vm667 = vcmp.lt.s32.totalorder %v666, 15
        %v668 = vsel %vm667, %v666, 15
        %v669 = vlaneseq
        %v670 = vshrl.u32 %v669, 7
        %v671 = vadd.s32 %v670, 8
        %v672 = vlaneseq
        %v673 = vshrl.u32 %v672, 7
        %v674 = vsub.s32 0, %v673
        %v675 = vrot.slane %v661, %v674
        %v676 = vlaneseq
        %v677 = vshrl.u32 %v676, 7
        %v678 = vsub.s32 1, %v677
        %v679 = vrot.slane %v661, %v678
        %vm680 = vcmp.eq.s32.totalorder %v670, %v675
        %vm681 = vcmp.eq.s32.totalorder %v670, %v679
        %vm682 = vcmp.eq.s32.totalorder %v671, %v675
        %vm683 = vcmp.eq.s32.totalorder %v671, %v679
        %v684 = vsel %vm680, 1, 0
        %v685 = vsel %vm681, 1, 0
        %v686 = vsel %vm682, 1, 0
        %v687 = vsel %vm683, 1, 0
        %v688 = vcvt.s32.f32 %v684
        %v689 = vcvt.s32.f32 %v685
        %v690 = vcvt.s32.f32 %v686
        %v691 = vcvt.s32.f32 %v687
        %v693 = vlaneseq
        %v694 = vshrl.u32 %v693, 7
        %v695 = vsub.s32 0, %v694
        %v696 = vrot.slane %v658, %v695
        %v697 = vlaneseq
        %v698 = vshrl.u32 %v697, 7
        %v699 = vsub.s32 1, %v698
        %v700 = vrot.slane %v658, %v699
        %v703 = vmul.f32 %v688, %v696
        %v704 = vmul.f32 %v689, %v700
        %v705 = vmul.f32 %v690, %v696
        %v706 = vmul.f32 %v691, %v700
        %v707 = vlaneseq
        %v708 = vshrl.u32 %v707, 7
        %v709 = vsub.s32 0, %v708
        %v710 = vrot.slane %v665, %v709
        %v711 = vlaneseq
        %v712 = vshrl.u32 %v711, 7
        %v713 = vsub.s32 1, %v712
        %v714 = vrot.slane %v665, %v713
        %vm715 = vcmp.eq.s32.totalorder %v670, %v710
        %vm716 = vcmp.eq.s32.totalorder %v670, %v714
        %vm717 = vcmp.eq.s32.totalorder %v671, %v710
        %vm718 = vcmp.eq.s32.totalorder %v671, %v714
        %v719 = vsel %vm715, 1, 0
        %v720 = vsel %vm716, 1, 0
        %v721 = vsel %vm717, 1, 0
        %v722 = vsel %vm718, 1, 0
        %v723 = vcvt.s32.f32 %v719
        %v724 = vcvt.s32.f32 %v720
        %v725 = vcvt.s32.f32 %v721
        %v726 = vcvt.s32.f32 %v722
        %v728 = vlaneseq
        %v729 = vshrl.u32 %v728, 7
        %v730 = vsub.s32 0, %v729
        %v731 = vrot.slane %v657, %v730
        %v732 = vlaneseq
        %v733 = vshrl.u32 %v732, 7
        %v734 = vsub.s32 1, %v733
        %v735 = vrot.slane %v657, %v734
        %v738 = vmul.f32 %v723, %v731
        %v739 = vmul.f32 %v724, %v735
        %v740 = vmul.f32 %v725, %v731
        %v741 = vmul.f32 %v726, %v735
        %v742 = vadd.f32 %v703, %v738
        %v743 = vadd.f32 %v704, %v739
        %v744 = vadd.f32 %v705, %v740
        %v745 = vadd.f32 %v706, %v741
        %v746 = vlaneseq
        %v747 = vshrl.u32 %v746, 7
        %v748 = vsub.s32 0, %v747
        %v749 = vrot.slane %v662, %v748
        %v750 = vlaneseq
        %v751 = vshrl.u32 %v750, 7
        %v752 = vsub.s32 1, %v751
        %v753 = vrot.slane %v662, %v752
        %vm754 = vcmp.eq.s32.totalorder %v670, %v749
        %vm755 = vcmp.eq.s32.totalorder %v670, %v753
        %vm756 = vcmp.eq.s32.totalorder %v671, %v749
        %vm757 = vcmp.eq.s32.totalorder %v671, %v753
        %v758 = vsel %vm754, 1, 0
        %v759 = vsel %vm755, 1, 0
        %v760 = vsel %vm756, 1, 0
        %v761 = vsel %vm757, 1, 0
        %v762 = vcvt.s32.f32 %v758
        %v763 = vcvt.s32.f32 %v759
        %v764 = vcvt.s32.f32 %v760
        %v765 = vcvt.s32.f32 %v761
        %v767 = vlaneseq
        %v768 = vshrl.u32 %v767, 7
        %v769 = vsub.s32 0, %v768
        %v770 = vrot.slane %v660, %v769
        %v771 = vlaneseq
        %v772 = vshrl.u32 %v771, 7
        %v773 = vsub.s32 1, %v772
        %v774 = vrot.slane %v660, %v773
        %v777 = vmul.f32 %v762, %v770
        %v778 = vmul.f32 %v763, %v774
        %v779 = vmul.f32 %v764, %v770
        %v780 = vmul.f32 %v765, %v774
        %v781 = vlaneseq
        %v782 = vshrl.u32 %v781, 7
        %v783 = vsub.s32 0, %v782
        %v784 = vrot.slane %v668, %v783
        %v785 = vlaneseq
        %v786 = vshrl.u32 %v785, 7
        %v787 = vsub.s32 1, %v786
        %v788 = vrot.slane %v668, %v787
        %vm789 = vcmp.eq.s32.totalorder %v670, %v784
        %vm790 = vcmp.eq.s32.totalorder %v670, %v788
        %vm791 = vcmp.eq.s32.totalorder %v671, %v784
        %vm792 = vcmp.eq.s32.totalorder %v671, %v788
        %v793 = vsel %vm789, 1, 0
        %v794 = vsel %vm790, 1, 0
        %v795 = vsel %vm791, 1, 0
        %v796 = vsel %vm792, 1, 0
        %v797 = vcvt.s32.f32 %v793
        %v798 = vcvt.s32.f32 %v794
        %v799 = vcvt.s32.f32 %v795
        %v800 = vcvt.s32.f32 %v796
        %v802 = vlaneseq
        %v803 = vshrl.u32 %v802, 7
        %v804 = vsub.s32 0, %v803
        %v805 = vrot.slane %v659, %v804
        %v806 = vlaneseq
        %v807 = vshrl.u32 %v806, 7
        %v808 = vsub.s32 1, %v807
        %v809 = vrot.slane %v659, %v808
        %v812 = vmul.f32 %v797, %v805
        %v813 = vmul.f32 %v798, %v809
        %v814 = vmul.f32 %v799, %v805
        %v815 = vmul.f32 %v800, %v809
        %v816 = vadd.f32 %v777, %v812
        %v817 = vadd.f32 %v778, %v813
        %v818 = vadd.f32 %v779, %v814
        %v819 = vadd.f32 %v780, %v815
        %v820 = vld [vmem:[%s507] sm:$0xff]
        %v821 = vld [vmem:[%s507 + $0x8] sm:$0xff]
        %v822 = vld [vmem:[%s507 + $0x10] sm:$0xff]
        %v823 = vld [vmem:[%s507 + $0x18] sm:$0xff]
        %v824 = vld [vmem:[%s507 + $0x20] sm:$0xff]
        %v825 = vld [vmem:[%s507 + $0x28] sm:$0xff]
        %vm826 = vcmask 130048
        %v828 = vsel %vm826, %v820, 0
        %v831 = vsel %vm826, %v821, 0
        %v834 = vsel %vm826, %v822, 0
        %v837 = vsel %vm826, %v823, 0
        %v840 = vsel %vm826, %v824, 0
        %v843 = vsel %vm826, %v825, 0
        %845 = vmatprep.subr.mxu0 %v743
        %846 = vmatpush1.msra.mxu0 %v742
        %847 = vmatprep.subr.mxu0 %v745
        %848 = vmatpush1.msra.mxu0 %v744
        %849 = vmatprep.subr.mxu0 0.0
        %850 = vmatpush1.msra.mxu0 0.0
        %851 = vmatprep.subr.mxu0 0.0
        %852 = vmatpush1.msra.mxu0 0.0
        %853 = vmatprep.subr.mxu0 0.0
        %854 = vmatpush1.msra.mxu0 0.0
        %855 = vmatprep.subr.mxu0 0.0
        %856 = vmatpush1.msra.mxu0 0.0
        %857 = vmatprep.subr.mxu0 0.0
        %858 = vmatpush1.msra.mxu0 0.0
        %859 = vmatprep.subr.mxu0 0.0
        %860 = vmatpush1.msra.mxu0 0.0
        %861 = vmatprep.subr.mxu0 0.0
        %862 = vmatpush1.msra.mxu0 0.0
        %863 = vmatprep.subr.mxu0 0.0
        %864 = vmatpush1.msra.mxu0 0.0
        %865 = vmatprep.subr.mxu0 0.0
        %866 = vmatpush1.msra.mxu0 0.0
        %867 = vmatprep.subr.mxu0 0.0
        %868 = vmatpush1.msra.mxu0 0.0
        %869 = vmatprep.subr.mxu0 0.0
        %870 = vmatpush1.msra.mxu0 0.0
        %871 = vmatprep.subr.mxu0 0.0
        %872 = vmatpush1.msra.mxu0 0.0
        %873 = vmatprep.subr.mxu0 0.0
        %874 = vmatpush1.msra.mxu0 0.0
        %875 = vmatprep.subr.mxu0 0.0
        %876 = vmatpush1.msra.mxu0 0.0
        %877 = vmatprep.subr.mxu0 0.0
        %878 = vmatpush1.msra.mxu0 0.0
        %879 = vmatprep.subr.mxu0 0.0
        %880 = vmatpush1.msra.mxu0 0.0
        %881 = vmatprep.subr.mxu0 0.0
        %882 = vmatpush1.msra.mxu0 0.0
        %883 = vmatprep.subr.mxu0 0.0
        %884 = vmatpush1.msra.mxu0 0.0
        %885 = vmatprep.subr.mxu0 0.0
        %886 = vmatpush1.msra.mxu0 0.0
        %887 = vmatprep.subr.mxu0 0.0
        %888 = vmatpush1.msra.mxu0 0.0
        %889 = vmatprep.subr.mxu0 0.0
        %890 = vmatpush1.msra.mxu0 0.0
        %891 = vmatprep.subr.mxu0 0.0
        %892 = vmatpush1.msra.mxu0 0.0
        %893 = vmatprep.subr.mxu0 0.0
        %894 = vmatpush1.msra.mxu0 0.0
        %895 = vmatprep.subr.mxu0 0.0
        %896 = vmatpush1.msra.mxu0 0.0
        %897 = vmatprep.subr.mxu0 0.0
        %898 = vmatpush1.msra.mxu0 0.0
        %899 = vmatprep.subr.mxu0 0.0
        %900 = vmatpush1.msra.mxu0 0.0
        %901 = vmatprep.subr.mxu0 0.0
        %902 = vmatpush1.msra.mxu0 0.0
        %903 = vmatprep.subr.mxu0 0.0
        %904 = vmatpush1.msra.mxu0 0.0
        %905 = vmatprep.subr.mxu0 0.0
        %906 = vmatpush1.msra.mxu0 0.0
        %907 = vmatprep.subr.mxu0 0.0
        %908 = vmatpush1.msra.mxu0 0.0
        %909 = vmatprep.mubr.f32.mxu0 0.0
        %910 = vmatmul.mubr.f32.gmra.mrb[0].mxu0 %v828
        %v911 = vpop.f32.mrb[0].mxu0
        %v912 = vadd.f32 0.0, %v911
        %v913 = vpop.f32.mrb[0].mxu0
        %v914 = vadd.f32 0.0, %v913
        %915 = vmatprep.mubr.f32.mxu0 0.0
        %916 = vmatmul.mubr.f32.gmra.mrb[0].mxu0 %v831
        %v917 = vpop.f32.mrb[0].mxu0
        %v918 = vadd.f32 0.0, %v917
        %v919 = vpop.f32.mrb[0].mxu0
        %v920 = vadd.f32 0.0, %v919
        %921 = vmatprep.mubr.f32.mxu0 0.0
        %922 = vmatmul.mubr.f32.gmra.mrb[0].mxu0 %v834
        %v923 = vpop.f32.mrb[0].mxu0
        %v924 = vadd.f32 0.0, %v923
        %v925 = vpop.f32.mrb[0].mxu0
        %v926 = vadd.f32 0.0, %v925
        %927 = vmatprep.mubr.f32.mxu0 0.0
        %928 = vmatmul.mubr.f32.gmra.mrb[0].mxu0 %v837
        %v929 = vpop.f32.mrb[0].mxu0
        %v930 = vadd.f32 0.0, %v929
        %v931 = vpop.f32.mrb[0].mxu0
        %v932 = vadd.f32 0.0, %v931
        %933 = vmatprep.mubr.f32.mxu0 0.0
        %934 = vmatmul.mubr.f32.gmra.mrb[0].mxu0 %v840
        %v935 = vpop.f32.mrb[0].mxu0
        %v936 = vadd.f32 0.0, %v935
        %v937 = vpop.f32.mrb[0].mxu0
        %v938 = vadd.f32 0.0, %v937
        %939 = vmatprep.mubr.f32.mxu0 0.0
        %940 = vmatmul.mubr.f32.gmra.mrb[0].mxu0 %v843
        %v941 = vpop.f32.mrb[0].mxu0
        %v942 = vadd.f32 0.0, %v941
        %v943 = vpop.f32.mrb[0].mxu0
        %v944 = vadd.f32 0.0, %v943
        %945 = vdwg.mxu0
        %v946 = vmul.f32 %v912, %v816
        %v947 = vmul.f32 %v914, %v817
        %v948 = vmul.f32 %v918, %v818
        %v949 = vmul.f32 %v920, %v819
        %v950 = vadd.f32 %v946, %v948
        %v951 = vrot.slane %v950, 4
        %v952 = vadd.f32 %v950, %v951
        %v953 = vrot.slane %v952, 2
        %v954 = vadd.f32 %v952, %v953
        %v955 = vrot.slane %v954, 1
        %v956 = vadd.f32 %v954, %v955
        %v957 = vadd.f32 %v947, %v949
        %v958 = vrot.slane %v957, 4
        %v959 = vadd.f32 %v957, %v958
        %v960 = vrot.slane %v959, 2
        %v961 = vadd.f32 %v959, %v960
        %v962 = vrot.slane %v961, 1
        %v963 = vadd.f32 %v961, %v962
        %v966 = vcombine.low %v956, %v963
        %v968 = vsub.f32 %v527, %v966
        %v969 = vmul.f32 %v968, %v968
        %v970 = vadd.f32 %v969, 0.0
        %v971 = vmul.f32 %v924, %v816
        %v972 = vmul.f32 %v926, %v817
        %v973 = vmul.f32 %v930, %v818
        %v974 = vmul.f32 %v932, %v819
        %v975 = vadd.f32 %v971, %v973
        %v976 = vrot.slane %v975, 4
        %v977 = vadd.f32 %v975, %v976
        %v978 = vrot.slane %v977, 2
        %v979 = vadd.f32 %v977, %v978
        %v980 = vrot.slane %v979, 1
        %v981 = vadd.f32 %v979, %v980
        %v982 = vadd.f32 %v972, %v974
        %v983 = vrot.slane %v982, 4
        %v984 = vadd.f32 %v982, %v983
        %v985 = vrot.slane %v984, 2
        %v986 = vadd.f32 %v984, %v985
        %v987 = vrot.slane %v986, 1
        %v988 = vadd.f32 %v986, %v987
        %v991 = vcombine.low %v981, %v988
        %v992 = vrot.slane %v991, 7
        %v994 = vsub.f32 %v527, %v992
        %v995 = vmul.f32 %v994, %v994
        %v997 = vrot.slane %v995, 5
        %v998 = vrot.slane %v997, 4
        %v1000 = vadd.f32 %v970, %v998
        %v1001 = vmul.f32 %v936, %v816
        %v1002 = vmul.f32 %v938, %v817
        %v1003 = vmul.f32 %v942, %v818
        %v1004 = vmul.f32 %v944, %v819
        %v1005 = vadd.f32 %v1001, %v1003
        %v1006 = vrot.slane %v1005, 4
        %v1007 = vadd.f32 %v1005, %v1006
        %v1008 = vrot.slane %v1007, 2
        %v1009 = vadd.f32 %v1007, %v1008
        %v1010 = vrot.slane %v1009, 1
        %v1011 = vadd.f32 %v1009, %v1010
        %v1012 = vadd.f32 %v1002, %v1004
        %v1013 = vrot.slane %v1012, 4
        %v1014 = vadd.f32 %v1012, %v1013
        %v1015 = vrot.slane %v1014, 2
        %v1016 = vadd.f32 %v1014, %v1015
        %v1017 = vrot.slane %v1016, 1
        %v1018 = vadd.f32 %v1016, %v1017
        %v1021 = vcombine.low %v1011, %v1018
        %v1022 = vrot.slane %v1021, 6
        %v1024 = vsub.f32 %v527, %v1022
        %v1025 = vmul.f32 %v1024, %v1024
        %v1027 = vrot.slane %v1025, 6
        %v1028 = vrot.slane %v1027, 4
        %v1030 = vadd.f32 %v1000, %v1028
        %v1031 = vlaneseq
        %vm1032 = vcmp.ge.s32.totalorder %v1031, 0
        %vm1033 = vcmp.lt.s32.totalorder %v1031, 256
        %vm1034 = vmand %vm1032, %vm1033
        %1035 = vst.msk [vmem:[%s516] ss:$2 sm:$0x3] %vm1034, %v630
        %s1036 = scalar_lea.vmem %s516, 1
        %1037 = vst.msk [vmem:[%s1036] ss:$2 sm:$0x3] %vm1034, %v650
        %vm1038 = vcmp.lt.f32.partialorder %v1030, 0.01
        %v1039 = vsel %vm1038, 1, 0
        %v1040 = vcvt.s32.f32 %v1039
        %v1043 = vunpack.c.l.s4 1966171168
        %v1044 = vunpack.c.0.s8 %v1043
        %v1045 = vlaneseq
        %v1046 = vshrl.u32 %v1045, 7
        %v1047 = vsub.s32 %v1044, %v1046
        %v1048 = vrot.slane %v1040, %v1047
        %v1050 = vunpack.c.l.s4 1966171168
        %v1051 = vunpack.c.0.s8 %v1050
        %v1052 = vlaneseq
        %v1053 = vshrl.u32 %v1052, 7
        %v1054 = vsub.s32 %v1051, %v1053
        %v1055 = vrot.slane %v1048, %v1054
        %1057 = vst.msk [vmem:[%s525] sm:$0x3] %vm1034, %v1055
        %s1058 = smul.u32 2, %s28
        %p1059 = scmp.lt.s32.totalorder %s27, 1
        %s1060 = scalar_select %p1059, %s27, 1
        %p1061 = scmp.lt.s32.totalorder %s1058, 1
        %s1062 = scalar_select %p1061, %s1058, 1
        %s1063 = smul.addr %s1060, 2
        %s1064 = sadd.s32 %s1062, %s1063
        %s1065 = smul.addr %s1064, 2
        %s1066 = scalar_lea.vmem %s8, %s1065
        %s1067 = smul.u32 2, %s28
        %p1068 = scmp.lt.s32.totalorder %s27, 1
        %s1069 = scalar_select %p1068, %s27, 1
        %p1070 = scmp.lt.s32.totalorder %s1067, 1
        %s1071 = scalar_select %p1070, %s1067, 1
        %s1072 = smul.addr %s1069, 2
        %s1073 = sadd.s32 %s1071, %s1072
        %s1074 = scalar_lea.vmem %s9, %s1073
        // Predicated region
        $region65: #{raft_forward.1} parent=51 // pred_check
          %p1075 = pneg %p252
        $region66: #{raft_forward.1} parent=51 // pred_check_branch
          %1077 = sbr.rel (%p1075) target = $region68
        $region67: #{raft_forward.1} parent=51 // pred_region
          %s1078 = smul.u32 2, %s28
        $region68: #{raft_forward.1} parent=51 // pred_fallthru
          _
        // Predicated region
        $region69: #{raft_forward.1} parent=51 // pred_check
          %p1079 = pneg %p280
        $region70: #{raft_forward.1} parent=51 // pred_check_branch
          %1081 = sbr.rel (%p1079) target = $region72
        $region71: #{raft_forward.1} parent=51 // pred_region
          %s1082 = smul.u32 2, %s28
        $region72: #{raft_forward.1} parent=51 // pred_fallthru
          _
      $region52: #{raft_forward.1} parent=5 // pred_fallthru
        _
      %p1083 = scmp.le.s32.totalorder 2, %s18
      // Predicated region
      $region73: #{raft_forward.1} parent=5 // pred_check
        %p1084 = pneg %p1083
      $region74: #{raft_forward.1} parent=5 // pred_check_branch
        %1086 = sbr.rel (%p1084) target = $region76
      $region75: #{raft_forward.1} parent=5 // pred_region
        %s1087 = ssub.s32 %s18, 2
        // Predicated region
        $region77: #{raft_forward.1} parent=75 // pred_check
          %p1088 = pneg %p258
        $region78: #{raft_forward.1} parent=75 // pred_check_branch
          %1090 = sbr.rel (%p1088) target = $region80
        $region79: #{raft_forward.1} parent=75 // pred_region
          %s1091 = smul.u32 2, %s30
          %p1092 = scmp.lt.s32.totalorder %s29, 1
          %s1093 = scalar_select %p1092, %s29, 1
          %p1094 = scmp.lt.s32.totalorder %s1091, 1
          %s1095 = scalar_select %p1094, %s1091, 1
          %s1096 = smul.addr %s1093, 2
          %s1097 = sadd.s32 %s1095, %s1096
          %s1098 = smul.addr %s1097, 2
          %s1099 = scalar_lea.vmem %s8, %s1098
        $region80: #{raft_forward.1} parent=75 // pred_fallthru
          _
        // Predicated region
        $region81: #{raft_forward.1} parent=75 // pred_check
          %p1100 = pneg %p286
        $region82: #{raft_forward.1} parent=75 // pred_check_branch
          %1102 = sbr.rel (%p1100) target = $region84
        $region83: #{raft_forward.1} parent=75 // pred_region
          %s1103 = smul.u32 2, %s30
          %p1104 = scmp.lt.s32.totalorder %s29, 1
          %s1105 = scalar_select %p1104, %s29, 1
          %p1106 = scmp.lt.s32.totalorder %s1103, 1
          %s1107 = scalar_select %p1106, %s1103, 1
          %s1108 = smul.addr %s1105, 2
          %s1109 = sadd.s32 %s1107, %s1108
          %s1110 = scalar_lea.vmem %s9, %s1109
        $region84: #{raft_forward.1} parent=75 // pred_fallthru
          _
      $region76: #{raft_forward.1} parent=5 // pred_fallthru
        _
    $region6: #{raft_forward.1} parent=1 // loop_footer
      %s22 = sadd.s32 1, %s18
    $region7: #{raft_forward.1} parent=1 // loop_footer_branch
      %17 = sbr.rel target = $region3
    $region8: #{raft_forward.1} parent=1 // loop_exit
      _
    %1111 = vsyncpa [#allocation3], 1
    %s1112 = scalar_lea.sflag [#allocation3], 1
    %1113 = vsyncpa %s1112, 1
    %1114 = vsyncpa [#allocation5], 1

</llo_original>
